<compile_context>
chip_gen: v7x
topology: tpu7x:2x2x1
jax: 0.10.0
libtpu: 0.0.40
codegen_flags: <defaults>
</compile_context>

<pallas_src>
import functools

import jax
import jax.numpy as jnp
from jax import lax
from jax.experimental import pallas as pl
from jax.experimental.pallas import tpu as pltpu


def _silu(x):
    return x * jax.nn.sigmoid(x)


def _round_up(x, m):
    return ((x + m - 1) // m) * m


def _energy_head_kernel(x_ref, ids_ref, w1_ref, b1_ref, w2_ref, b2_ref, w3_ref,
                        out_ref, iota_ref, *, bf16_act):
    """Grid = (core, node_tile).  Accumulates one per-graph energy row per core."""
    i = pl.program_id(1)

    # Output block index is constant along the node-tile axis -> VMEM-resident
    # accumulator; iota for the one-hot is built once (JAX does not CSE broadcasts).
    @pl.when(i == 0)
    def _():
        out_ref[...] = jnp.zeros_like(out_ref)
        iota_ref[...] = lax.broadcasted_iota(jnp.int32, iota_ref.shape, 1)

    act_dt = jnp.bfloat16 if bf16_act else jnp.float32

    # ---- MLP hot path: bf16 operands on the MXU, f32 accumulation ----
    x = x_ref[...]                                                              # (TN, S) bf16
    h = jnp.dot(x, w1_ref[...], preferred_element_type=jnp.float32) + b1_ref[...]
    h = _silu(h.astype(act_dt)).astype(jnp.bfloat16)
    h = jnp.dot(h, w2_ref[...], preferred_element_type=jnp.float32) + b2_ref[...]
    h = _silu(h.astype(act_dt)).astype(jnp.bfloat16)
    e = jnp.dot(h, w3_ref[...], preferred_element_type=jnp.float32)            # (TN, 1), no b3

    # ---- per-graph segment-sum as a bf16 MXU contraction over the node axis ----
    ids = ids_ref[...]                                                          # (TN, 1) int32
    valid = ids >= 0                                                            # padded rows: id == -1
    # NOTE: keep this mask even though padded x rows are zeros -- it guards any future
    #       change that could make padded-row energies non-finite.
    e = jnp.where(valid, e, 0.0).astype(jnp.bfloat16)

    one_hot = (ids == iota_ref[...]).astype(jnp.bfloat16)                       # (TN, gp), exact 0/1

    dn = (((0,), (0,)), ((), ()))                                               # contract node axis
    e_part = lax.dot_general(e, one_hot, dn,
                             preferred_element_type=jnp.float32)                # (1, gp)
    out_ref[...] += e_part[None]                                                # (1, 1, gp)


def prepare_params(params):
    """Pad/cast weights once, outside the jitted wrapper (cacheable across calls)."""
    w1, b1, w2, b2, w3, b3 = params
    s, h = w1.shape
    hp = _round_up(h, 128)   # zero padding is exact for this MLP

    w1p = jnp.zeros((s, hp), jnp.bfloat16).at[:, :h].set(w1.astype(jnp.bfloat16))
    b1p = jnp.zeros((1, hp), jnp.float32).at[:, :h].set(b1.astype(jnp.float32))
    w2p = jnp.zeros((hp, hp), jnp.bfloat16).at[:h, :h].set(w2.astype(jnp.bfloat16))
    b2p = jnp.zeros((1, hp), jnp.float32).at[:, :h].set(b2.astype(jnp.float32))
    w3p = jnp.zeros((hp, 1), jnp.bfloat16).at[:h, :].set(w3.astype(jnp.bfloat16))
    b3s = jnp.reshape(b3.astype(jnp.float32), ())
    return (w1p, b1p, w2p, b2p, w3p, b3s)


@functools.partial(jax.jit, static_argnames=("num_graphs", "reduce", "tile_n",
                                             "num_cores", "bf16_act"))
def mlp_energy_head(node_embedding, batch, natoms, prepared_params, *,
                    num_graphs, reduce="sum", tile_n=1024, num_cores=1,
                    bf16_act=False):
    """node_embedding: [N, L, S]; batch: [N] int32 graph ids; natoms: [num_graphs]."""
    w1p, b1p, w2p, b2p, w3p, b3 = prepared_params
    n = node_embedding.shape[0]
    s = w1p.shape[0]
    hp = w1p.shape[1]
    gp = _round_up(num_graphs, 128)

    # ---- generation-aware VMEM budget --------------------------------------
    try:
        vmem_cap = int(pltpu.get_tpu_info().vmem_capacity_bytes)
    except Exception:
        vmem_cap = 64 * 2**20                       # conservative (v7x-sized) fallback

    def _vmem_bytes(t):
        return (2 * t * s * 2                       # x tiles, bf16, double-buffered
                + 2 * t * 4                         # id tiles, int32, double-buffered
                + 2 * (s * hp + hp * hp + hp) * 2   # weights, bf16, double-buffered
                + 2 * 2 * hp * 4                    # biases, f32, double-buffered
                + 2 * gp * 4                        # output accumulator block
                + t * gp * 4                        # iota scratch (int32)
                + t * gp * 2                        # one-hot (bf16)
                + 3 * t * hp * 4                    # live f32 activation slabs
                + (4 << 20))                        # headroom

    # Node tiling: big tiles amortize per-step overhead & fill the MXU.
    tile = max(16, min(_round_up(tile_n, 16), _round_up(n, 16)))
    budget = int(0.55 * vmem_cap)
    while tile > 256 and _vmem_bytes(tile) > budget:
        tile = max(256, tile // 2)
    est = _vmem_bytes(tile)
    vmem_limit = int(min(int(0.9 * vmem_cap), max(2 * est, 32 * 2**20)))
    vmem_limit = max(vmem_limit, est + (4 << 20))

    n_tiles = pl.cdiv(n, tile)
    tiles_per_core = pl.cdiv(n_tiles, num_cores)
    total_rows = num_cores * tiles_per_core * tile

    # ---- dense, zero-padded l==0 node-feature slab (bf16) -------------------
    # One wrapper-side pass replaces a per-row strided DMA (stride L*S, segment S)
    # that is descriptor/latency-bound for small S, and halves the HBM read.
    x2d = node_embedding[:, 0, :].astype(jnp.bfloat16)
    xp = jnp.zeros((total_rows, s), jnp.bfloat16).at[:n].set(x2d)
    ids = jnp.full((total_rows, 1), -1, jnp.int32).at[:n, 0].set(batch.astype(jnp.int32))

    def x_map(c, i):
        return (c * tiles_per_core + i, 0)

    const = lambda c, i: (0, 0)

    if num_cores > 1 and hasattr(pltpu, "CORE_PARALLEL"):
        dim_sem = (pltpu.CORE_PARALLEL, pltpu.ARBITRARY)    # v7x: shard node tiles across TCs
    else:
        dim_sem = ("parallel", "arbitrary")

    kernel = functools.partial(_energy_head_kernel, bf16_act=bf16_act)

    out = pl.pallas_call(
        kernel,
        out_shape=jax.ShapeDtypeStruct((num_cores, 1, gp), jnp.float32),
        grid=(num_cores, tiles_per_core),
        in_specs=[
            pl.BlockSpec((tile, s), x_map),        # node features (bf16, dense DMA)
            pl.BlockSpec((tile, 1), x_map),        # graph ids
            pl.BlockSpec((s, hp), const),          # w1 (resident)
            pl.BlockSpec((1, hp), const),          # b1
            pl.BlockSpec((hp, hp), const),         # w2
            pl.BlockSpec((1, hp), const),          # b2
            pl.BlockSpec((hp, 1), const),          # w3 (b3 folded in the wrapper)
        ],
        out_specs=pl.BlockSpec((1, 1, gp), lambda c, i: (c, 0, 0)),
        scratch_shapes=[pltpu.VMEM((tile, gp), jnp.int32)],   # hoisted one-hot iota
        compiler_params=pltpu.CompilerParams(
            dimension_semantics=dim_sem,
            vmem_limit_bytes=vmem_limit),
    )(xp, ids, w1p, b1p, w2p, b2p, w3p)

    acc = jnp.sum(out[:, 0, :], axis=0)                      # (gp,) combine per-core rows
    # Per-graph node count == natoms in fairchem (batch is consistent with natoms),
    # so the last-layer bias folds back in exactly as b3 * natoms.
    energy = acc[:num_graphs] + b3 * natoms.astype(jnp.float32)

    if reduce == "sum":
        pass
    elif reduce == "mean":
        energy = energy / natoms.astype(jnp.float32)
    else:
        raise ValueError(f"reduce can only be sum or mean, user provided: {reduce}")
    return {"energy": energy}


def init_params(key, sphere_channels, hidden_channels):
    """Deterministic init mimicking nn.Linear default (uniform +-1/sqrt(fan_in))."""
    ks = jax.random.split(key, 6)

    def linear(kw, kb, fan_in, fan_out):
        bound = 1.0 / jnp.sqrt(jnp.float32(fan_in))
        w = jax.random.uniform(kw, (fan_in, fan_out), jnp.float32, -bound, bound)
        b = jax.random.uniform(kb, (fan_out,), jnp.float32, -bound, bound)
        return w, b

    w1, b1 = linear(ks[0], ks[1], sphere_channels, hidden_channels)
    w2, b2 = linear(ks[2], ks[3], hidden_channels, hidden_channels)
    w3, b3 = linear(ks[4], ks[5], hidden_channels, 1)
    return (w1, b1, w2, b2, w3, b3)


def _reference(node_embedding, batch, params, num_graphs):
    w1, b1, w2, b2, w3, b3 = params
    x = node_embedding[:, 0, :]
    h = _silu(x @ w1 + b1)
    h = _silu(h @ w2 + b2)
    e = (h @ w3 + b3)[:, 0]
    return jax.ops.segment_sum(e, batch, num_segments=num_graphs)


if __name__ == "__main__":
    key = jax.random.PRNGKey(0)
    k_emb, k_par = jax.random.split(key)

    # Small synthetic shapes: N=10 nodes, L=4 spherical slots, S=16, H=32, 2 graphs.
    N, L, S, H = 10, 4, 16, 32
    num_graphs = 2
    node_embedding = jax.random.normal(k_emb, (N, L, S), jnp.float32)
    batch = jnp.array([0, 0, 0, 0, 0, 0, 1, 1, 1, 1], jnp.int32)
    natoms = jnp.array([6, 4], jnp.int32)

    params = init_params(k_par, S, H)
    prepared = prepare_params(params)

    out = mlp_energy_head(node_embedding, batch, natoms, prepared,
                          num_graphs=num_graphs, reduce="sum")
    energy = jax.block_until_ready(out["energy"])

    ref = _reference(node_embedding, batch, params, num_graphs)
    assert energy.shape == (num_graphs,)
    # bf16 weight/activation streams in the kernel -> compare to the f32 reference
    # with an appropriately loose tolerance.
    assert jnp.allclose(energy, ref, atol=5e-2, rtol=5e-2), (energy, ref)

    out_mean = mlp_energy_head(node_embedding, batch, natoms, prepared,
                               num_graphs=num_graphs, reduce="mean")
    energy_mean = jax.block_until_ready(out_mean["energy"])
    ref_mean = ref / natoms.astype(jnp.float32)
    assert jnp.allclose(energy_mean, ref_mean, atol=5e-2, rtol=5e-2), (energy_mean, ref_mean)

    print("KERNEL_OK")
</pallas_src>

<mosaic_0001>
module attributes {stable_mosaic.version = 11 : i64} {
  func.func @_energy_head_kernel(%arg0: i32, %arg1: i32, %arg2: memref<16x16xbf16, #tpu.memory_space<vmem>>, %arg3: memref<16x1xi32, #tpu.memory_space<vmem>>, %arg4: memref<16x128xbf16, #tpu.memory_space<vmem>>, %arg5: memref<1x128xf32, #tpu.memory_space<vmem>>, %arg6: memref<128x128xbf16, #tpu.memory_space<vmem>>, %arg7: memref<1x128xf32, #tpu.memory_space<vmem>>, %arg8: memref<128x1xbf16, #tpu.memory_space<vmem>>, %arg9: memref<1x1x128xf32, #tpu.memory_space<vmem>>, %arg10: memref<16x128xi32, #tpu.memory_space<vmem>>) attributes {dimension_semantics = [#tpu.dimension_semantics<parallel>, #tpu.dimension_semantics<arbitrary>], iteration_bounds = array<i64: 1, 1>, scalar_prefetch = 0 : i64, scratch_operands = 1 : i64, tpu.core_type = #tpu.core_type<tc>, window_params = [{transform_indices = @transform_0, window_bounds = array<i64: 16, 16>}, {transform_indices = @transform_1, window_bounds = array<i64: 16, 1>}, {pipeline_mode = #tpu.pipeline_mode<synchronous>, transform_indices = @transform_2, window_bounds = array<i64: 16, 128>}, {pipeline_mode = #tpu.pipeline_mode<synchronous>, transform_indices = @transform_3, window_bounds = array<i64: 1, 128>}, {pipeline_mode = #tpu.pipeline_mode<synchronous>, transform_indices = @transform_4, window_bounds = array<i64: 128, 128>}, {pipeline_mode = #tpu.pipeline_mode<synchronous>, transform_indices = @transform_5, window_bounds = array<i64: 1, 128>}, {pipeline_mode = #tpu.pipeline_mode<synchronous>, transform_indices = @transform_6, window_bounds = array<i64: 128, 1>}, {transform_indices = @transform_7, window_bounds = array<i64: 1, 1, 128>}]} {
    %c0_i32 = arith.constant 0 : i32
    %0 = arith.cmpi eq, %arg1, %c0_i32 : i32
    %1 = arith.extui %0 : i1 to i32
    %c0_i32_0 = arith.constant 0 : i32
    %2 = arith.cmpi ne, %1, %c0_i32_0 : i32
    scf.if %2 {
      %cst_29 = arith.constant 0.000000e+00 : f32
      %47 = vector.broadcast %cst_29 : f32 to vector<1x1x128xf32>
      %c0_30 = arith.constant 0 : index
      %c0_31 = arith.constant 0 : index
      %c0_32 = arith.constant 0 : index
      %48 = vector.load %arg9[%c0_30, %c0_31, %c0_32] : memref<1x1x128xf32, #tpu.memory_space<vmem>>, vector<1x1x128xf32>
      tpu.vector_store %arg9[%c0_30, %c0_31, %c0_32], %47 {strides = array<i32>} : memref<1x1x128xf32, #tpu.memory_space<vmem>>, vector<1x1x128xf32>,
      %49 = tpu.iota {dimensions = array<i32: 1>} : vector<16x128xi32>
      %c0_33 = arith.constant 0 : index
      %c0_34 = arith.constant 0 : index
      %50 = vector.load %arg10[%c0_33, %c0_34] : memref<16x128xi32, #tpu.memory_space<vmem>>, vector<16x128xi32>
      tpu.vector_store %arg10[%c0_33, %c0_34], %49 {strides = array<i32>} : memref<16x128xi32, #tpu.memory_space<vmem>>, vector<16x128xi32>,
    } else {
    }
    %c0 = arith.constant 0 : index
    %c0_1 = arith.constant 0 : index
    %3 = vector.load %arg2[%c0, %c0_1] : memref<16x16xbf16, #tpu.memory_space<vmem>>, vector<16x16xbf16>
    %c0_2 = arith.constant 0 : index
    %c0_3 = arith.constant 0 : index
    %4 = vector.load %arg4[%c0_2, %c0_3] : memref<16x128xbf16, #tpu.memory_space<vmem>>, vector<16x128xbf16>
    %cst = arith.constant dense<0.000000e+00> : vector<16x128xf32>
    %5 = tpu.matmul %3, %4, %cst {dimension_numbers = #tpu.dot_dimension_numbers<[1], [0], [0], [1], [0, 0, 1, 1], [], []>} : vector<16x16xbf16>, vector<16x128xbf16>, vector<16x128xf32> -> vector<16x128xf32>
    %c0_4 = arith.constant 0 : index
    %c0_5 = arith.constant 0 : index
    %6 = vector.load %arg5[%c0_4, %c0_5] : memref<1x128xf32, #tpu.memory_space<vmem>>, vector<1x128xf32>
    %7 = vector.broadcast %6 : vector<1x128xf32> to vector<16x128xf32>
    %8 = arith.addf %5, %7 : vector<16x128xf32>
    %9 = arith.negf %8 : vector<16x128xf32>
    %10 = math.exp %9 : vector<16x128xf32>
    %cst_6 = arith.constant 1.000000e+00 : f32
    %11 = vector.broadcast %cst_6 : f32 to vector<16x128xf32>
    %12 = arith.addf %11, %10 : vector<16x128xf32>
    %13 = arith.divf %11, %12 : vector<16x128xf32>
    %14 = arith.mulf %8, %13 : vector<16x128xf32>
    %15 = arith.truncf %14 : vector<16x128xf32> to vector<16x128xbf16>
    %c0_7 = arith.constant 0 : index
    %c0_8 = arith.constant 0 : index
    %16 = vector.load %arg6[%c0_7, %c0_8] : memref<128x128xbf16, #tpu.memory_space<vmem>>, vector<128x128xbf16>
    %cst_9 = arith.constant dense<0.000000e+00> : vector<16x128xf32>
    %17 = tpu.matmul %15, %16, %cst_9 {dimension_numbers = #tpu.dot_dimension_numbers<[1], [0], [0], [1], [0, 0, 1, 1], [], []>} : vector<16x128xbf16>, vector<128x128xbf16>, vector<16x128xf32> -> vector<16x128xf32>
    %c0_10 = arith.constant 0 : index
    %c0_11 = arith.constant 0 : index
    %18 = vector.load %arg7[%c0_10, %c0_11] : memref<1x128xf32, #tpu.memory_space<vmem>>, vector<1x128xf32>
    %19 = vector.broadcast %18 : vector<1x128xf32> to vector<16x128xf32>
    %20 = arith.addf %17, %19 : vector<16x128xf32>
    %21 = arith.negf %20 : vector<16x128xf32>
    %22 = math.exp %21 : vector<16x128xf32>
    %cst_12 = arith.constant 1.000000e+00 : f32
    %23 = vector.broadcast %cst_12 : f32 to vector<16x128xf32>
    %24 = arith.addf %23, %22 : vector<16x128xf32>
    %25 = arith.divf %23, %24 : vector<16x128xf32>
    %26 = arith.mulf %20, %25 : vector<16x128xf32>
    %27 = arith.truncf %26 : vector<16x128xf32> to vector<16x128xbf16>
    %c0_13 = arith.constant 0 : index
    %c0_14 = arith.constant 0 : index
    %28 = vector.load %arg8[%c0_13, %c0_14] : memref<128x1xbf16, #tpu.memory_space<vmem>>, vector<128x1xbf16>
    %cst_15 = arith.constant dense<0.000000e+00> : vector<16x1xf32>
    %29 = tpu.matmul %27, %28, %cst_15 {dimension_numbers = #tpu.dot_dimension_numbers<[1], [0], [0], [1], [0, 0, 1, 1], [], []>} : vector<16x128xbf16>, vector<128x1xbf16>, vector<16x1xf32> -> vector<16x1xf32>
    %c0_16 = arith.constant 0 : index
    %c0_17 = arith.constant 0 : index
    %30 = vector.load %arg3[%c0_16, %c0_17] : memref<16x1xi32, #tpu.memory_space<vmem>>, vector<16x1xi32>
    %c0_i32_18 = arith.constant 0 : i32
    %31 = vector.broadcast %c0_i32_18 : i32 to vector<16x1xi32>
    %32 = arith.cmpi sge, %30, %31 : vector<16x1xi32>
    %cst_19 = arith.constant 0.000000e+00 : f32
    %33 = vector.broadcast %cst_19 : f32 to vector<16x1xf32>
    %34 = arith.select %32, %29, %33 : vector<16x1xi1>, vector<16x1xf32>
    %35 = arith.truncf %34 : vector<16x1xf32> to vector<16x1xbf16>
    %c0_20 = arith.constant 0 : index
    %c0_21 = arith.constant 0 : index
    %36 = vector.load %arg10[%c0_20, %c0_21] : memref<16x128xi32, #tpu.memory_space<vmem>>, vector<16x128xi32>
    %37 = vector.broadcast %30 : vector<16x1xi32> to vector<16x128xi32>
    %38 = arith.cmpi eq, %37, %36 : vector<16x128xi32>
    %39 = arith.extui %38 : vector<16x128xi1> to vector<16x128xi32>
    %40 = arith.sitofp %39 : vector<16x128xi32> to vector<16x128xf32>
    %41 = arith.truncf %40 : vector<16x128xf32> to vector<16x128xbf16>
    %cst_22 = arith.constant dense<0.000000e+00> : vector<1x128xf32>
    %42 = tpu.matmul %35, %41, %cst_22 {dimension_numbers = #tpu.dot_dimension_numbers<[0], [0], [1], [1], [0, 1, 1, 1], [], []>} : vector<16x1xbf16>, vector<16x128xbf16>, vector<1x128xf32> -> vector<1x128xf32>
    %c0_23 = arith.constant 0 : index
    %c0_24 = arith.constant 0 : index
    %c0_25 = arith.constant 0 : index
    %43 = vector.load %arg9[%c0_23, %c0_24, %c0_25] : memref<1x1x128xf32, #tpu.memory_space<vmem>>, vector<1x1x128xf32>
    %44 = vector.shape_cast %42 : vector<1x128xf32> to vector<1x1x128xf32>
    %45 = arith.addf %43, %44 : vector<1x1x128xf32>
    %c0_26 = arith.constant 0 : index
    %c0_27 = arith.constant 0 : index
    %c0_28 = arith.constant 0 : index
    %46 = vector.load %arg9[%c0_26, %c0_27, %c0_28] : memref<1x1x128xf32, #tpu.memory_space<vmem>>, vector<1x1x128xf32>
    tpu.vector_store %arg9[%c0_26, %c0_27, %c0_28], %45 {strides = array<i32>} : memref<1x1x128xf32, #tpu.memory_space<vmem>>, vector<1x1x128xf32>,
    return
  }
  func.func @transform_0(%arg0: i32, %arg1: i32) -> (i32, i32) {
    %c1_i32 = arith.constant 1 : i32
    %0 = arith.muli %arg0, %c1_i32 : i32
    %1 = arith.addi %0, %arg1 : i32
    %c0_i32 = arith.constant 0 : i32
    %c0_i32_0 = arith.constant 0 : i32
    return %1, %c0_i32 : i32, i32
  }
  func.func @transform_1(%arg0: i32, %arg1: i32) -> (i32, i32) {
    %c1_i32 = arith.constant 1 : i32
    %0 = arith.muli %arg0, %c1_i32 : i32
    %1 = arith.addi %0, %arg1 : i32
    %c0_i32 = arith.constant 0 : i32
    %c0_i32_0 = arith.constant 0 : i32
    return %1, %c0_i32 : i32, i32
  }
  func.func @transform_2(%arg0: i32, %arg1: i32) -> (i32, i32) {
    %c0_i32 = arith.constant 0 : i32
    %c0_i32_0 = arith.constant 0 : i32
    %c0_i32_1 = arith.constant 0 : i32
    return %c0_i32, %c0_i32_0 : i32, i32
  }
  func.func @transform_3(%arg0: i32, %arg1: i32) -> (i32, i32) {
    %c0_i32 = arith.constant 0 : i32
    %c0_i32_0 = arith.constant 0 : i32
    %c0_i32_1 = arith.constant 0 : i32
    return %c0_i32, %c0_i32_0 : i32, i32
  }
  func.func @transform_4(%arg0: i32, %arg1: i32) -> (i32, i32) {
    %c0_i32 = arith.constant 0 : i32
    %c0_i32_0 = arith.constant 0 : i32
    %c0_i32_1 = arith.constant 0 : i32
    return %c0_i32, %c0_i32_0 : i32, i32
  }
  func.func @transform_5(%arg0: i32, %arg1: i32) -> (i32, i32) {
    %c0_i32 = arith.constant 0 : i32
    %c0_i32_0 = arith.constant 0 : i32
    %c0_i32_1 = arith.constant 0 : i32
    return %c0_i32, %c0_i32_0 : i32, i32
  }
  func.func @transform_6(%arg0: i32, %arg1: i32) -> (i32, i32) {
    %c0_i32 = arith.constant 0 : i32
    %c0_i32_0 = arith.constant 0 : i32
    %c0_i32_1 = arith.constant 0 : i32
    return %c0_i32, %c0_i32_0 : i32, i32
  }
  func.func @transform_7(%arg0: i32, %arg1: i32) -> (i32, i32, i32) {
    %c0_i32 = arith.constant 0 : i32
    %c0_i32_0 = arith.constant 0 : i32
    %c0_i32_1 = arith.constant 0 : i32
    return %arg0, %c0_i32, %c0_i32_0 : i32, i32, i32
  }
}

</mosaic_0001>

<llo_original>
// kernel: mlp_energy_head.1
$region0: #{mlp_energy_head.1}
  #allocation0 [shape = 'u32[]', space=smem, size = 0x4, offset = 0x4, fixed_abs, tag = 'smem constant byte address 0x4 - core index']
  #allocation1 [shape = 'u32[144,128]{1,0:T(1,128)}', space=vmem, size = 0x12000, scoped, tag = 'internal scratch']
  #allocation2 [shape = 's32[16,128]{1,0:T(8,128)}', space=vmem, size = 0x2000, scoped, tag = 'scratch operand']
  %s0 = inlined_call_operand.vmem [shape: bf16[16,16], index: 0, kind: input, shape index: {}]
  %s1 = inlined_call_operand.vmem [shape: s32[16,1], index: 1, kind: input, shape index: {}]
  %s2 = inlined_call_operand.vmem [shape: bf16[16,128], index: 2, kind: input, shape index: {}]
  %s3 = inlined_call_operand.vmem [shape: f32[1,128], index: 3, kind: input, shape index: {}]
  %s4 = inlined_call_operand.vmem [shape: bf16[128,128], index: 4, kind: input, shape index: {}]
  %s5 = inlined_call_operand.vmem [shape: f32[1,128], index: 5, kind: input, shape index: {}]
  %s6 = inlined_call_operand.vmem [shape: bf16[128,1], index: 6, kind: input, shape index: {}]
  %s7 = inlined_call_operand.vmem [shape: f32[1,1,128], index: 7, kind: output, shape index: {}]
  %s8 = sld [smem:[#allocation0]]
  $region42: #{mlp_energy_head.1} parent=0
    _
  %s10 = ssub.s32 1, %s8
  %s11 = scalar_select 0, %s10, %s8
  // Predicated region
  $region2: #{mlp_energy_head.1} parent=0 // pred_check
    _
  $region3: #{mlp_energy_head.1} parent=0 // pred_check_branch
    %13 = sbr.rel (0) target = $region5
  $region4: #{mlp_energy_head.1} parent=0 // pred_region
    %s14 = sadd.s32 0, 0
    %s15 = smul.u32 2, %s14
    %p16 = scmp.lt.s32.totalorder %s15, 1
    %s17 = scalar_select %p16, %s15, 1
    %s18 = smul.addr %s17, 4
    %s19 = scalar_lea.vmem %s0, %s18
    %s20 = sadd.s32 0, 0
    %s21 = smul.u32 2, %s20
  $region5: #{mlp_energy_head.1} parent=0 // pred_fallthru
    _
  // Predicated region
  $region6: #{mlp_energy_head.1} parent=0 // pred_check
    _
  $region7: #{mlp_energy_head.1} parent=0 // pred_check_branch
    %23 = sbr.rel (0) target = $region9
  $region8: #{mlp_energy_head.1} parent=0 // pred_region
    %s24 = sadd.s32 0, 0
    %s25 = smul.u32 2, %s24
    %p26 = scmp.lt.s32.totalorder %s25, 1
    %s27 = scalar_select %p26, %s25, 1
    %s28 = smul.addr %s27, 8
    %s29 = scalar_lea.vmem %s1, %s28
    %s30 = sadd.s32 0, 0
    %s31 = smul.u32 2, %s30
  $region9: #{mlp_energy_head.1} parent=0 // pred_fallthru
    _
  // Predicated region
  $region10: #{mlp_energy_head.1} parent=0 // pred_check
    _
  $region11: #{mlp_energy_head.1} parent=0 // pred_check_branch
    %33 = sbr.rel (0) target = $region13
  $region12: #{mlp_energy_head.1} parent=0 // pred_region
    _
  $region13: #{mlp_energy_head.1} parent=0 // pred_fallthru
    _
  // Predicated region
  $region14: #{mlp_energy_head.1} parent=0 // pred_check
    _
  $region15: #{mlp_energy_head.1} parent=0 // pred_check_branch
    %35 = sbr.rel (0) target = $region17
  $region16: #{mlp_energy_head.1} parent=0 // pred_region
    _
  $region17: #{mlp_energy_head.1} parent=0 // pred_fallthru
    _
  // Predicated region
  $region18: #{mlp_energy_head.1} parent=0 // pred_check
    _
  $region19: #{mlp_energy_head.1} parent=0 // pred_check_branch
    %37 = sbr.rel (0) target = $region21
  $region20: #{mlp_energy_head.1} parent=0 // pred_region
    _
  $region21: #{mlp_energy_head.1} parent=0 // pred_fallthru
    _
  // Predicated region
  $region22: #{mlp_energy_head.1} parent=0 // pred_check
    _
  $region23: #{mlp_energy_head.1} parent=0 // pred_check_branch
    %39 = sbr.rel (0) target = $region25
  $region24: #{mlp_energy_head.1} parent=0 // pred_region
    _
  $region25: #{mlp_energy_head.1} parent=0 // pred_fallthru
    _
  // Predicated region
  $region26: #{mlp_energy_head.1} parent=0 // pred_check
    _
  $region27: #{mlp_energy_head.1} parent=0 // pred_check_branch
    %41 = sbr.rel (0) target = $region29
  $region28: #{mlp_energy_head.1} parent=0 // pred_region
    _
  $region29: #{mlp_energy_head.1} parent=0 // pred_fallthru
    _
  %s42 = sadd.s32 0, 0
  %s43 = smul.u32 2, %s42
  %p44 = scmp.lt.s32.totalorder %s43, 1
  %s45 = scalar_select %p44, %s43, 1
  %s46 = smul.addr %s45, 4
  %s47 = scalar_lea.vmem %s0, %s46
  %s48 = sadd.s32 0, 0
  %s49 = smul.u32 2, %s48
  %p50 = scmp.lt.s32.totalorder %s49, 1
  %s51 = scalar_select %p50, %s49, 1
  %s52 = smul.addr %s51, 8
  %s53 = scalar_lea.vmem %s1, %s52
  %s54 = sadd.s32 0, 0
  %s55 = smul.u32 2, %s54
  %p56 = scmp.lt.s32.totalorder %s55, 1
  %s57 = scalar_select %p56, %s55, 1
  %s58 = smul.addr %s57, 4
  %s59 = scalar_lea.vmem %s0, %s58
  %s60 = sadd.s32 0, 0
  %s61 = smul.u32 2, %s60
  %s62 = sadd.s32 0, 0
  %s63 = smul.u32 2, %s62
  %p64 = scmp.lt.s32.totalorder %s63, 1
  %s65 = scalar_select %p64, %s63, 1
  %s66 = smul.addr %s65, 8
  %s67 = scalar_lea.vmem %s1, %s66
  %s68 = sadd.s32 0, 0
  %s69 = smul.u32 2, %s68
  %p71 = scmp.eq.s32.totalorder 0, 0
  // Predicated region
  $region30: #{mlp_energy_head.1} parent=0 // pred_check
    %p72 = pneg %p71
  $region31: #{mlp_energy_head.1} parent=0 // pred_check_branch
    %74 = sbr.rel (%p72) target = $region33
  $region32: #{mlp_energy_head.1} parent=0 // pred_region
    %75 = vst [vmem:[%s7] sm:$0x1] 0.0
    %v76 = vlaneseq
    %v77 = vand.u32 %v76, 127
    %78 = vst [vmem:[#allocation2] sm:$0xff] %v77
    %79 = vst [vmem:[#allocation2 + $0x8] sm:$0xff] %v77
  $region33: #{mlp_energy_head.1} parent=0 // pred_fallthru
    _
  %v80 = vld [vmem:[%s59] sm:$0xf]
  %v81 = vld [vmem:[%s59 + $0x4] sm:$0xf]
  %v82 = vld [vmem:[%s2] sm:$0xf]
  %v83 = vld [vmem:[%s2 + $0x4] sm:$0xf]
  %v84 = vld [vmem:[%s3] sm:$0x1]
  %v86 = vlaneseq
  %v87 = vshrl.u32 %v86, 7
  %v88 = vsub.s32 0, %v87
  %v89 = vrot.slane %v84, %v88
  %v93 = vunpack.c.l.b16 %v80
  %v94 = vunpack.c.l.b16 %v81
  %v95 = vpack.c.b16 %v94, %v93
  %v98 = vunpack.c.l.b16 %v82
  %v99 = vunpack.c.l.b16 %v83
  %v100 = vpack.c.b16 %v99, %v98
  %vm102 = vcmask 130048
  %v104 = vsel %vm102, %v95, 0
  %106 = vmatprep.subr.bf16.mxu0 0
  %107 = vmatpush1.bf16.msra.mxu0 %v100
  %108 = vmatprep.subr.bf16.mxu0 0
  %109 = vmatpush1.bf16.msra.mxu0 0
  %110 = vmatprep.subr.bf16.mxu0 0
  %111 = vmatpush1.bf16.msra.mxu0 0
  %112 = vmatprep.subr.bf16.mxu0 0
  %113 = vmatpush1.bf16.msra.mxu0 0
  %114 = vmatprep.subr.bf16.mxu0 0
  %115 = vmatpush1.bf16.msra.mxu0 0
  %116 = vmatprep.subr.bf16.mxu0 0
  %117 = vmatpush1.bf16.msra.mxu0 0
  %118 = vmatprep.subr.bf16.mxu0 0
  %119 = vmatpush1.bf16.msra.mxu0 0
  %120 = vmatprep.subr.bf16.mxu0 0
  %121 = vmatpush1.bf16.msra.mxu0 0
  %122 = vmatprep.subr.bf16.mxu0 0
  %123 = vmatpush1.bf16.msra.mxu0 0
  %124 = vmatprep.subr.bf16.mxu0 0
  %125 = vmatpush1.bf16.msra.mxu0 0
  %126 = vmatprep.subr.bf16.mxu0 0
  %127 = vmatpush1.bf16.msra.mxu0 0
  %128 = vmatprep.subr.bf16.mxu0 0
  %129 = vmatpush1.bf16.msra.mxu0 0
  %130 = vmatprep.subr.bf16.mxu0 0
  %131 = vmatpush1.bf16.msra.mxu0 0
  %132 = vmatprep.subr.bf16.mxu0 0
  %133 = vmatpush1.bf16.msra.mxu0 0
  %134 = vmatprep.subr.bf16.mxu0 0
  %135 = vmatpush1.bf16.msra.mxu0 0
  %136 = vmatprep.subr.bf16.mxu0 0
  %137 = vmatpush1.bf16.msra.mxu0 0
  %138 = vmatprep.mubr.bf16.mxu0 0
  %139 = vmatmul.mubr.bf16.gmra.mrb[0].mxu0 %v104
  %v140 = vpop.f32.mrb[0].mxu0
  %v141 = vadd.f32 %v89, %v140
  %v142 = vpop.f32.mrb[0].mxu0
  %v143 = vpop.f32.mrb[0].mxu0
  %v144 = vadd.f32 %v89, %v143
  %v145 = vpop.f32.mrb[0].mxu0
  %146 = vdwg.mxu0
  %v147 = vxor.u32 %v141, 2147483648
  %v148 = vxor.u32 %v144, 2147483648
  %v149 = vmul.f32 %v147, 1.442695
  %v150 = vpow.pop %v149
  %v151 = vmul.f32 %v148, 1.442695
  %v152 = vpow.pop %v151
  %v153 = vadd.f32 %v150, 1.0
  %v154 = vadd.f32 %v152, 1.0
  %v155 = vrcp.pop %v153
  %v156 = vmul.f32 1.0, %v155
  %v157 = vrcp.pop %v154
  %v158 = vmul.f32 1.0, %v157
  %v159 = vmul.f32 %v141, %v156
  %v160 = vmul.f32 %v144, %v158
  %v161 = vpack.c.bf16 %v160, %v159
  %v162 = vld [vmem:[%s4] sm:$0xf]
  %v163 = vld [vmem:[%s4 + $0x4] sm:$0xf]
  %v164 = vld [vmem:[%s4 + $0x8] sm:$0xf]
  %v165 = vld [vmem:[%s4 + $0xc] sm:$0xf]
  %v166 = vld [vmem:[%s4 + $0x10] sm:$0xf]
  %v167 = vld [vmem:[%s4 + $0x14] sm:$0xf]
  %v168 = vld [vmem:[%s4 + $0x18] sm:$0xf]
  %v169 = vld [vmem:[%s4 + $0x1c] sm:$0xf]
  %v170 = vld [vmem:[%s4 + $0x20] sm:$0xf]
  %v171 = vld [vmem:[%s4 + $0x24] sm:$0xf]
  %v172 = vld [vmem:[%s4 + $0x28] sm:$0xf]
  %v173 = vld [vmem:[%s4 + $0x2c] sm:$0xf]
  %v174 = vld [vmem:[%s4 + $0x30] sm:$0xf]
  %v175 = vld [vmem:[%s4 + $0x34] sm:$0xf]
  %v176 = vld [vmem:[%s4 + $0x38] sm:$0xf]
  %v177 = vld [vmem:[%s4 + $0x3c] sm:$0xf]
  %v178 = vld [vmem:[%s5] sm:$0x1]
  %v180 = vlaneseq
  %v181 = vshrl.u32 %v180, 7
  %v182 = vsub.s32 0, %v181
  %v183 = vrot.slane %v178, %v182
  %v201 = vunpack.c.l.b16 %v162
  %v202 = vunpack.c.l.b16 %v163
  %v203 = vunpack.c.l.b16 %v164
  %v204 = vunpack.c.l.b16 %v165
  %v205 = vunpack.c.l.b16 %v166
  %v206 = vunpack.c.l.b16 %v167
  %v207 = vunpack.c.l.b16 %v168
  %v208 = vunpack.c.l.b16 %v169
  %v209 = vunpack.c.l.b16 %v170
  %v210 = vunpack.c.l.b16 %v171
  %v211 = vunpack.c.l.b16 %v172
  %v212 = vunpack.c.l.b16 %v173
  %v213 = vunpack.c.l.b16 %v174
  %v214 = vunpack.c.l.b16 %v175
  %v215 = vunpack.c.l.b16 %v176
  %v216 = vunpack.c.l.b16 %v177
  %v217 = vpack.c.b16 %v202, %v201
  %v218 = vpack.c.b16 %v204, %v203
  %v219 = vpack.c.b16 %v206, %v205
  %v220 = vpack.c.b16 %v208, %v207
  %v221 = vpack.c.b16 %v210, %v209
  %v222 = vpack.c.b16 %v212, %v211
  %v223 = vpack.c.b16 %v214, %v213
  %v224 = vpack.c.b16 %v216, %v215
  %233 = vmatprep.subr.bf16.mxu0 0
  %234 = vmatpush1.bf16.msra.mxu0 %v217
  %235 = vmatprep.subr.bf16.mxu0 0
  %236 = vmatpush1.bf16.msra.mxu0 %v218
  %237 = vmatprep.subr.bf16.mxu0 0
  %238 = vmatpush1.bf16.msra.mxu0 %v219
  %239 = vmatprep.subr.bf16.mxu0 0
  %240 = vmatpush1.bf16.msra.mxu0 %v220
  %241 = vmatprep.subr.bf16.mxu0 0
  %242 = vmatpush1.bf16.msra.mxu0 %v221
  %243 = vmatprep.subr.bf16.mxu0 0
  %244 = vmatpush1.bf16.msra.mxu0 %v222
  %245 = vmatprep.subr.bf16.mxu0 0
  %246 = vmatpush1.bf16.msra.mxu0 %v223
  %247 = vmatprep.subr.bf16.mxu0 0
  %248 = vmatpush1.bf16.msra.mxu0 %v224
  %249 = vmatprep.subr.bf16.mxu0 0
  %250 = vmatpush1.bf16.msra.mxu0 0
  %251 = vmatprep.subr.bf16.mxu0 0
  %252 = vmatpush1.bf16.msra.mxu0 0
  %253 = vmatprep.subr.bf16.mxu0 0
  %254 = vmatpush1.bf16.msra.mxu0 0
  %255 = vmatprep.subr.bf16.mxu0 0
  %256 = vmatpush1.bf16.msra.mxu0 0
  %257 = vmatprep.subr.bf16.mxu0 0
  %258 = vmatpush1.bf16.msra.mxu0 0
  %259 = vmatprep.subr.bf16.mxu0 0
  %260 = vmatpush1.bf16.msra.mxu0 0
  %261 = vmatprep.subr.bf16.mxu0 0
  %262 = vmatpush1.bf16.msra.mxu0 0
  %263 = vmatprep.subr.bf16.mxu0 0
  %264 = vmatpush1.bf16.msra.mxu0 0
  %265 = vmatprep.mubr.bf16.mxu0 0
  %266 = vmatmul.mubr.bf16.gmra.mrb[0].mxu0 %v161
  %v267 = vpop.f32.mrb[0].mxu0
  %v268 = vadd.f32 %v183, %v267
  %v269 = vpop.f32.mrb[0].mxu0
  %v270 = vpop.f32.mrb[0].mxu0
  %v271 = vadd.f32 %v183, %v270
  %v272 = vpop.f32.mrb[0].mxu0
  %273 = vdwg.mxu0
  %v274 = vxor.u32 %v268, 2147483648
  %v275 = vxor.u32 %v271, 2147483648
  %v276 = vmul.f32 %v274, 1.442695
  %v277 = vpow.pop %v276
  %v278 = vmul.f32 %v275, 1.442695
  %v279 = vpow.pop %v278
  %v280 = vadd.f32 %v277, 1.0
  %v281 = vadd.f32 %v279, 1.0
  %v282 = vrcp.pop %v280
  %v283 = vmul.f32 1.0, %v282
  %v284 = vrcp.pop %v281
  %v285 = vmul.f32 1.0, %v284
  %v286 = vmul.f32 %v268, %v283
  %v287 = vmul.f32 %v271, %v285
  %v288 = vpack.c.bf16 %v287, %v286
  %v289 = vld [vmem:[%s6] sm:$0xf]
  %v290 = vld [vmem:[%s6 + $0x4] sm:$0xf]
  %v291 = vld [vmem:[%s6 + $0x8] sm:$0xf]
  %v292 = vld [vmem:[%s6 + $0xc] sm:$0xf]
  %v293 = vld [vmem:[%s6 + $0x10] sm:$0xf]
  %v294 = vld [vmem:[%s6 + $0x14] sm:$0xf]
  %v295 = vld [vmem:[%s6 + $0x18] sm:$0xf]
  %v296 = vld [vmem:[%s6 + $0x1c] sm:$0xf]
  %v297 = vld [vmem:[%s6 + $0x20] sm:$0xf]
  %v298 = vld [vmem:[%s6 + $0x24] sm:$0xf]
  %v299 = vld [vmem:[%s6 + $0x28] sm:$0xf]
  %v300 = vld [vmem:[%s6 + $0x2c] sm:$0xf]
  %v301 = vld [vmem:[%s6 + $0x30] sm:$0xf]
  %v302 = vld [vmem:[%s6 + $0x34] sm:$0xf]
  %v303 = vld [vmem:[%s6 + $0x38] sm:$0xf]
  %v304 = vld [vmem:[%s6 + $0x3c] sm:$0xf]
  %v321 = vunpack.c.l.b16 %v289
  %v322 = vunpack.c.l.b16 %v290
  %v323 = vunpack.c.l.b16 %v291
  %v324 = vunpack.c.l.b16 %v292
  %v325 = vunpack.c.l.b16 %v293
  %v326 = vunpack.c.l.b16 %v294
  %v327 = vunpack.c.l.b16 %v295
  %v328 = vunpack.c.l.b16 %v296
  %v329 = vunpack.c.l.b16 %v297
  %v330 = vunpack.c.l.b16 %v298
  %v331 = vunpack.c.l.b16 %v299
  %v332 = vunpack.c.l.b16 %v300
  %v333 = vunpack.c.l.b16 %v301
  %v334 = vunpack.c.l.b16 %v302
  %v335 = vunpack.c.l.b16 %v303
  %v336 = vunpack.c.l.b16 %v304
  %v337 = vpack.c.b16 %v322, %v321
  %v338 = vpack.c.b16 %v324, %v323
  %v339 = vpack.c.b16 %v326, %v325
  %v340 = vpack.c.b16 %v328, %v327
  %v341 = vpack.c.b16 %v330, %v329
  %v342 = vpack.c.b16 %v332, %v331
  %v343 = vpack.c.b16 %v334, %v333
  %v344 = vpack.c.b16 %v336, %v335
  %353 = vmatprep.subr.bf16.mxu0 0
  %354 = vmatpush1.bf16.msra.mxu0 %v337
  %355 = vmatprep.subr.bf16.mxu0 0
  %356 = vmatpush1.bf16.msra.mxu0 %v338
  %357 = vmatprep.subr.bf16.mxu0 0
  %358 = vmatpush1.bf16.msra.mxu0 %v339
  %359 = vmatprep.subr.bf16.mxu0 0
  %360 = vmatpush1.bf16.msra.mxu0 %v340
  %361 = vmatprep.subr.bf16.mxu0 0
  %362 = vmatpush1.bf16.msra.mxu0 %v341
  %363 = vmatprep.subr.bf16.mxu0 0
  %364 = vmatpush1.bf16.msra.mxu0 %v342
  %365 = vmatprep.subr.bf16.mxu0 0
  %366 = vmatpush1.bf16.msra.mxu0 %v343
  %367 = vmatprep.subr.bf16.mxu0 0
  %368 = vmatpush1.bf16.msra.mxu0 %v344
  %369 = vmatprep.subr.bf16.mxu0 0
  %370 = vmatpush1.bf16.msra.mxu0 0
  %371 = vmatprep.subr.bf16.mxu0 0
  %372 = vmatpush1.bf16.msra.mxu0 0
  %373 = vmatprep.subr.bf16.mxu0 0
  %374 = vmatpush1.bf16.msra.mxu0 0
  %375 = vmatprep.subr.bf16.mxu0 0
  %376 = vmatpush1.bf16.msra.mxu0 0
  %377 = vmatprep.subr.bf16.mxu0 0
  %378 = vmatpush1.bf16.msra.mxu0 0
  %379 = vmatprep.subr.bf16.mxu0 0
  %380 = vmatpush1.bf16.msra.mxu0 0
  %381 = vmatprep.subr.bf16.mxu0 0
  %382 = vmatpush1.bf16.msra.mxu0 0
  %383 = vmatprep.subr.bf16.mxu0 0
  %384 = vmatpush1.bf16.msra.mxu0 0
  %385 = vmatprep.mubr.bf16.mxu0 0
  %386 = vmatmul.mubr.bf16.gmra.mrb[0].mxu0 %v288
  %v387 = vpop.f32.mrb[0].mxu0
  %v388 = vadd.f32 0.0, %v387
  %v389 = vpop.f32.mrb[0].mxu0
  %v390 = vpop.f32.mrb[0].mxu0
  %v391 = vadd.f32 0.0, %v390
  %v392 = vpop.f32.mrb[0].mxu0
  %393 = vdwg.mxu0
  %v394 = vld [vmem:[%s67] sm:$0xff]
  %v395 = vld [vmem:[%s67 + $0x8] sm:$0xff]
  %vm396 = vcmp.ge.s32.totalorder %v394, 0
  %vm397 = vcmp.ge.s32.totalorder %v395, 0
  %v398 = vsel %vm396, %v388, 0.0
  %v399 = vsel %vm397, %v391, 0.0
  %v400 = vpack.c.bf16 %v399, %v398
  %v401 = vld [vmem:[#allocation2] sm:$0xff]
  %v402 = vld [vmem:[#allocation2 + $0x8] sm:$0xff]
  %403 = vset.pattern.permute.xlu0 0
  %404 = vperm.xlu0 %403, %v394
  %v405 = vpop.permute.xlu0 %404
  %406 = vset.pattern.permute.xlu0 0
  %407 = vperm.xlu0 %406, %v395
  %v408 = vpop.permute.xlu0 %407
  %vm409 = vcmp.eq.s32.totalorder %v405, %v401
  %vm410 = vcmp.eq.s32.totalorder %v408, %v402
  %v411 = vsel %vm409, 1, 0
  %v412 = vsel %vm410, 1, 0
  %v413 = vcvt.s32.f32 %v411
  %v414 = vcvt.s32.f32 %v412
  %v415 = vpack.c.bf16 %v414, %v413
  %416 = vxpose.xlu0.c.b16.start [1/8] %v400, 128
  %417 = vxpose.xlu0.c.b16.cont [2/8] 0, 128
  %418 = vxpose.xlu0.c.b16.cont [3/8] 0, 128
  %419 = vxpose.xlu0.c.b16.cont [4/8] 0, 128
  %420 = vxpose.xlu0.c.b16.cont [5/8] 0, 128
  %421 = vxpose.xlu0.c.b16.cont [6/8] 0, 128
  %422 = vxpose.xlu0.c.b16.cont [7/8] 0, 128
  %423 = vxpose.xlu0.c.b16.end [8/8] 0, 128
  %v424 = vpop.trf.xlu0
  %v425 = vpop.trf.xlu0
  %v426 = vpop.trf.xlu0
  %v427 = vpop.trf.xlu0
  %v428 = vpop.trf.xlu0
  %v429 = vpop.trf.xlu0
  %v430 = vpop.trf.xlu0
  %v431 = vpop.trf.xlu0
  %v433 = vsel %vm102, %v424, 0
  %435 = vmatprep.subr.bf16.mxu0 0
  %436 = vmatpush1.bf16.msra.mxu0 %v415
  %437 = vmatprep.subr.bf16.mxu0 0
  %438 = vmatpush1.bf16.msra.mxu0 0
  %439 = vmatprep.subr.bf16.mxu0 0
  %440 = vmatpush1.bf16.msra.mxu0 0
  %441 = vmatprep.subr.bf16.mxu0 0
  %442 = vmatpush1.bf16.msra.mxu0 0
  %443 = vmatprep.subr.bf16.mxu0 0
  %444 = vmatpush1.bf16.msra.mxu0 0
  %445 = vmatprep.subr.bf16.mxu0 0
  %446 = vmatpush1.bf16.msra.mxu0 0
  %447 = vmatprep.subr.bf16.mxu0 0
  %448 = vmatpush1.bf16.msra.mxu0 0
  %449 = vmatprep.subr.bf16.mxu0 0
  %450 = vmatpush1.bf16.msra.mxu0 0
  %451 = vmatprep.subr.bf16.mxu0 0
  %452 = vmatpush1.bf16.msra.mxu0 0
  %453 = vmatprep.subr.bf16.mxu0 0
  %454 = vmatpush1.bf16.msra.mxu0 0
  %455 = vmatprep.subr.bf16.mxu0 0
  %456 = vmatpush1.bf16.msra.mxu0 0
  %457 = vmatprep.subr.bf16.mxu0 0
  %458 = vmatpush1.bf16.msra.mxu0 0
  %459 = vmatprep.subr.bf16.mxu0 0
  %460 = vmatpush1.bf16.msra.mxu0 0
  %461 = vmatprep.subr.bf16.mxu0 0
  %462 = vmatpush1.bf16.msra.mxu0 0
  %463 = vmatprep.subr.bf16.mxu0 0
  %464 = vmatpush1.bf16.msra.mxu0 0
  %465 = vmatprep.subr.bf16.mxu0 0
  %466 = vmatpush1.bf16.msra.mxu0 0
  %467 = vmatprep.mubr.bf16.mxu0 0
  %468 = vmatmul.mubr.bf16.gmra.mrb[0].mxu0 %v433
  %v469 = vpop.f32.mrb[0].mxu0
  %v470 = vadd.f32 0.0, %v469
  %v471 = vpop.f32.mrb[0].mxu0
  %v472 = vpop.f32.mrb[0].mxu0
  %v473 = vpop.f32.mrb[0].mxu0
  %474 = vdwg.mxu0
  %v475 = vld [vmem:[%s7] sm:$0x1]
  %v476 = vadd.f32 %v475, %v470
  %477 = vst [vmem:[%s7] sm:$0x1] %v476
  // Predicated region
  $region34: #{mlp_energy_head.1} parent=0 // pred_check
    _
  $region35: #{mlp_energy_head.1} parent=0 // pred_check_branch
    %479 = sbr.rel (0) target = $region37
  $region36: #{mlp_energy_head.1} parent=0 // pred_region
    _
  $region37: #{mlp_energy_head.1} parent=0 // pred_fallthru
    _
  // Predicated region
  $region38: #{mlp_energy_head.1} parent=0 // pred_check
    _
  $region39: #{mlp_energy_head.1} parent=0 // pred_check_branch
    %481 = sbr.rel (0) target = $region41
  $region40: #{mlp_energy_head.1} parent=0 // pred_region
    _
  $region41: #{mlp_energy_head.1} parent=0 // pred_fallthru
    _

</llo_original>
